<compile_context>
chip_gen: v6e
topology: v6e:2x2x1
jax: 0.10.0
libtpu: 0.0.40
codegen_flags: <defaults>
</compile_context>

<pallas_src>
import jax
import jax.numpy as jnp
from jax.experimental import pallas as pl
from jax.experimental.pallas import tpu as pltpu


HIDDEN_DIM = 64
DEPTH = 3            # -> Linear(1,H), (DEPTH-1) x Linear(H,H), Linear(H,1)
LANE = 128           # TPU lane width; batch tiles are multiples of this
DEFAULT_TILE_N = 4096


def _round_up(v, m):
    return ((v + m - 1) // m) * m


def _mlp_kernel(x_ref, wh_ref, vecs_ref, o_ref):
    """x_ref: [1, Nt] f32, wh_ref: [nh, H, H] bf16 (resident),
    vecs_ref: [H, nh+4] f32 (resident), o_ref: [1, Nt] f32."""
    nh = wh_ref.shape[0]                 # static number of HxH hidden layers
    vp = vecs_ref[...]                   # [H, nh+4] f32 parameter columns
    w1 = vp[:, 0:1]                      # Linear(1,H) weight column  [H,1]
    b1 = vp[:, 1:2]                      # Linear(1,H) bias           [H,1]
    w4 = vp[:, nh + 2:nh + 3]            # Linear(H,1) weight column  [H,1]
    b4 = vp[0:1, nh + 3:nh + 4]          # Linear(H,1) bias (scalar)  [1,1]

    x = x_ref[...]                       # [1, Nt] f32

    # Layer 1: Linear(1 -> H) + ReLU.  K=1 => VPU broadcast multiply, f32.
    h = jnp.maximum(w1 * x + b1, 0.0)    # [H, Nt] f32

    # Hidden layers: bf16 operands on the MXU, f32 accumulation;
    # bias add + ReLU stay f32 on the VPU.
    for l in range(nh):
        h = jnp.dot(wh_ref[l], h.astype(jnp.bfloat16),
                    preferred_element_type=jnp.float32)      # [H, Nt] f32
        h = jnp.maximum(h + vp[:, 2 + l:3 + l], 0.0)

    # Output layer: Linear(H -> 1).  M=1 => VPU multiply + sublane (XLU)
    # reduction instead of a fill/drain-dominated MXU dot.
    y = jnp.sum(w4 * h, axis=0, keepdims=True) + b4          # [1, Nt] f32
    o_ref[...] = y.astype(o_ref.dtype)


def pack_params(params):
    """Pack PyTorch-style params into 2 resident kernel operands.

    params: list of (W [out,in], b [out]) pairs (PyTorch layout).
    Returns (wh [nh,H,H] bf16, vecs [H, nh+4] f32).
    """
    (w1, b1) = params[0]
    (w4, b4) = params[-1]
    hidden = params[1:-1]
    h_dim = w1.shape[0]
    nh = len(hidden)

    wh = jnp.stack([w for (w, _) in hidden]).astype(jnp.bfloat16)  # [nh,H,H]

    vecs = jnp.zeros((h_dim, nh + 4), jnp.float32)
    vecs = vecs.at[:, 0].set(w1[:, 0])          # layer-1 weight column
    vecs = vecs.at[:, 1].set(b1)                # layer-1 bias
    for l, (_, bh) in enumerate(hidden):
        vecs = vecs.at[:, 2 + l].set(bh)        # hidden biases
    vecs = vecs.at[:, nh + 2].set(w4[0, :])     # output weight row -> column
    vecs = vecs.at[:, nh + 3].set(b4[0])        # output bias (broadcast)
    return wh, vecs


def poly_nn_forward(x, params, tile_n=DEFAULT_TILE_N):
    """x: [N, 1] float32.  params: list of (W [out,in], b [out]) pairs.

    Returns [N, 1] float32.
    """
    n = x.shape[0]
    wh, vecs = pack_params(params)

    # Lane-dense layout: batch on the 128-lane axis.  No jnp.pad copy —
    # Pallas masks the ragged last block's read/store, and every batch
    # column is independent, so padded lanes never contaminate valid ones.
    xt = x.reshape(1, n)

    # Batch tile selection:
    #   * multiple of 128 lanes, large by default (amortize per-step overhead)
    #   * keep >= 2 grid steps whenever the batch spans >= 2 lane tiles
    #     (v7x megacore), without shrinking large-N tiles.
    tn_req = max(LANE, (int(tile_n) // LANE) * LANE)
    n_lanes = _round_up(n, LANE)
    if n_lanes >= 2 * tn_req:
        tn = tn_req                                   # large N: big tiles, grid >= 2
    elif n_lanes >= 2 * LANE:
        tn = _round_up(n_lanes // 2, LANE)            # moderate N: exactly 2 steps
    else:
        tn = n_lanes                                  # tiny N: single lane tile
    grid = (pl.cdiv(n, tn),)

    # x / y stream across the grid; packed weights stay VMEM-resident
    # (index_map always returns block 0, so they are fetched once).
    yt = pl.pallas_call(
        _mlp_kernel,
        out_shape=jax.ShapeDtypeStruct((1, n), jnp.float32),
        grid=grid,
        in_specs=[
            pl.BlockSpec((1, tn), lambda i: (0, i)),          # x (streamed)
            pl.BlockSpec(wh.shape, lambda i: (0, 0, 0)),      # hidden weights
            pl.BlockSpec(vecs.shape, lambda i: (0, 0)),       # packed vectors
        ],
        out_specs=pl.BlockSpec((1, tn), lambda i: (0, i)),
        compiler_params=pltpu.CompilerParams(
            dimension_semantics=("parallel",)),
    )(xt, wh, vecs)

    return yt.reshape(n, 1)


def init_params(key, hidden_dim=HIDDEN_DIM, depth=DEPTH):
    """Deterministic init mimicking PyTorch's default U(-1/sqrt(fan_in), +...).

    Weights are PyTorch-native [out, in]; biases are [out]."""
    dims = [1] + [hidden_dim] * depth + [1]   # [1, H, H, H, 1]
    params = []
    for i in range(len(dims) - 1):
        fan_in, fan_out = dims[i], dims[i + 1]
        key, kw, kb = jax.random.split(key, 3)
        bound = 1.0 / (fan_in ** 0.5)
        w = jax.random.uniform(kw, (fan_out, fan_in), jnp.float32, -bound, bound)
        b = jax.random.uniform(kb, (fan_out,), jnp.float32, -bound, bound)
        params.append((w, b))
    return params


def reference_forward(x, params):
    """Pure-JAX f32 reference in the standard [N, F] layout."""
    h = x
    for i, (w, b) in enumerate(params):
        h = h @ w.T + b
        if i < len(params) - 1:
            h = jnp.maximum(h, 0.0)
    return h


if __name__ == "__main__":
    root = jax.random.PRNGKey(0)
    kp, key = jax.random.split(root)
    params = init_params(kp)

    # (N, tile_n) cases:
    #   128  -> single-tile grid
    #   300  -> ragged batch, 2-step grid, masked last-block store
    #   1000 -> 2-step grid via the "moderate N" split (megacore path)
    #   1000 @ tile_n=128 -> 8-step grid with VMEM-resident weights
    cases = ((128, DEFAULT_TILE_N), (300, DEFAULT_TILE_N),
             (1000, DEFAULT_TILE_N), (1000, 128))
    for n, tile_n in cases:
        key, kx = jax.random.split(key)
        x = jax.random.uniform(kx, (n, 1), jnp.float32, -3.0, 3.0)
        y = jax.block_until_ready(poly_nn_forward(x, params, tile_n=tile_n))
        y_ref = reference_forward(x, params)
        assert y.shape == (n, 1)
        # Hidden-layer matmuls use bf16 operands on the MXU => loosened
        # tolerance vs. the pure-f32 reference.
        assert jnp.allclose(y, y_ref, atol=5e-2, rtol=5e-2), \
            f"mismatch (N={n}, tile_n={tile_n})"

    print("KERNEL_OK")
</pallas_src>

<mosaic_0001>
module attributes {stable_mosaic.version = 11 : i64} {
  func.func @_mlp_kernel(%arg0: i32, %arg1: memref<1x128xf32, #tpu.memory_space<vmem>>, %arg2: memref<2x64x64xbf16, #tpu.memory_space<vmem>>, %arg3: memref<64x6xf32, #tpu.memory_space<vmem>>, %arg4: memref<1x128xf32, #tpu.memory_space<vmem>>) attributes {dimension_semantics = [#tpu.dimension_semantics<parallel>], iteration_bounds = array<i64: 1>, scalar_prefetch = 0 : i64, scratch_operands = 0 : i64, tpu.core_type = #tpu.core_type<tc>, window_params = [{transform_indices = @transform_0, window_bounds = array<i64: 1, 128>}, {pipeline_mode = #tpu.pipeline_mode<synchronous>, transform_indices = @transform_1, window_bounds = array<i64: 2, 64, 64>}, {pipeline_mode = #tpu.pipeline_mode<synchronous>, transform_indices = @transform_2, window_bounds = array<i64: 64, 6>}, {transform_indices = @transform_3, window_bounds = array<i64: 1, 128>}]} {
    %c0 = arith.constant 0 : index
    %c0_0 = arith.constant 0 : index
    %0 = vector.load %arg3[%c0, %c0_0] : memref<64x6xf32, #tpu.memory_space<vmem>>, vector<64x6xf32>
    %1 = vector.extract_strided_slice %0 {offsets = [0, 0], sizes = [64, 1], strides = [1, 1]} : vector<64x6xf32> to vector<64x1xf32>
    %2 = vector.extract_strided_slice %0 {offsets = [0, 1], sizes = [64, 1], strides = [1, 1]} : vector<64x6xf32> to vector<64x1xf32>
    %3 = vector.extract_strided_slice %0 {offsets = [0, 4], sizes = [64, 1], strides = [1, 1]} : vector<64x6xf32> to vector<64x1xf32>
    %4 = vector.extract_strided_slice %0 {offsets = [0, 5], sizes = [1, 1], strides = [1, 1]} : vector<64x6xf32> to vector<1x1xf32>
    %c0_1 = arith.constant 0 : index
    %c0_2 = arith.constant 0 : index
    %5 = vector.load %arg1[%c0_1, %c0_2] : memref<1x128xf32, #tpu.memory_space<vmem>>, vector<1x128xf32>
    %6 = vector.broadcast %1 : vector<64x1xf32> to vector<64x128xf32>
    %7 = vector.broadcast %5 : vector<1x128xf32> to vector<64x128xf32>
    %8 = arith.mulf %6, %7 : vector<64x128xf32>
    %9 = vector.broadcast %2 : vector<64x1xf32> to vector<64x128xf32>
    %10 = arith.addf %8, %9 : vector<64x128xf32>
    %cst = arith.constant 0.000000e+00 : f32
    %11 = vector.broadcast %cst : f32 to vector<64x128xf32>
    %12 = arith.maximumf %10, %11 : vector<64x128xf32>
    %c0_3 = arith.constant 0 : index
    %c0_4 = arith.constant 0 : index
    %c0_5 = arith.constant 0 : index
    %13 = vector.load %arg2[%c0_3, %c0_4, %c0_5] : memref<2x64x64xbf16, #tpu.memory_space<vmem>>, vector<1x64x64xbf16>
    %14 = vector.shape_cast %13 : vector<1x64x64xbf16> to vector<64x64xbf16>
    %15 = arith.truncf %12 : vector<64x128xf32> to vector<64x128xbf16>
    %cst_6 = arith.constant dense<0.000000e+00> : vector<64x128xf32>
    %16 = tpu.matmul %14, %15, %cst_6 {dimension_numbers = #tpu.dot_dimension_numbers<[1], [0], [0], [1], [0, 0, 1, 1], [], []>} : vector<64x64xbf16>, vector<64x128xbf16>, vector<64x128xf32> -> vector<64x128xf32>
    %17 = vector.extract_strided_slice %0 {offsets = [0, 2], sizes = [64, 1], strides = [1, 1]} : vector<64x6xf32> to vector<64x1xf32>
    %18 = vector.broadcast %17 : vector<64x1xf32> to vector<64x128xf32>
    %19 = arith.addf %16, %18 : vector<64x128xf32>
    %cst_7 = arith.constant 0.000000e+00 : f32
    %20 = vector.broadcast %cst_7 : f32 to vector<64x128xf32>
    %21 = arith.maximumf %19, %20 : vector<64x128xf32>
    %c1 = arith.constant 1 : index
    %c0_8 = arith.constant 0 : index
    %c0_9 = arith.constant 0 : index
    %22 = vector.load %arg2[%c1, %c0_8, %c0_9] : memref<2x64x64xbf16, #tpu.memory_space<vmem>>, vector<1x64x64xbf16>
    %23 = vector.shape_cast %22 : vector<1x64x64xbf16> to vector<64x64xbf16>
    %24 = arith.truncf %21 : vector<64x128xf32> to vector<64x128xbf16>
    %cst_10 = arith.constant dense<0.000000e+00> : vector<64x128xf32>
    %25 = tpu.matmul %23, %24, %cst_10 {dimension_numbers = #tpu.dot_dimension_numbers<[1], [0], [0], [1], [0, 0, 1, 1], [], []>} : vector<64x64xbf16>, vector<64x128xbf16>, vector<64x128xf32> -> vector<64x128xf32>
    %26 = vector.extract_strided_slice %0 {offsets = [0, 3], sizes = [64, 1], strides = [1, 1]} : vector<64x6xf32> to vector<64x1xf32>
    %27 = vector.broadcast %26 : vector<64x1xf32> to vector<64x128xf32>
    %28 = arith.addf %25, %27 : vector<64x128xf32>
    %cst_11 = arith.constant 0.000000e+00 : f32
    %29 = vector.broadcast %cst_11 : f32 to vector<64x128xf32>
    %30 = arith.maximumf %28, %29 : vector<64x128xf32>
    %31 = vector.broadcast %3 : vector<64x1xf32> to vector<64x128xf32>
    %32 = arith.mulf %31, %30 : vector<64x128xf32>
    %cst_12 = arith.constant dense<0.000000e+00> : vector<128xf32>
    %33 = vector.multi_reduction <add>, %32, %cst_12 [0] : vector<64x128xf32> to vector<128xf32>
    %34 = vector.shape_cast %33 : vector<128xf32> to vector<1x128xf32>
    %35 = vector.broadcast %4 : vector<1x1xf32> to vector<1x128xf32>
    %36 = arith.addf %34, %35 : vector<1x128xf32>
    %c0_13 = arith.constant 0 : index
    %c0_14 = arith.constant 0 : index
    %37 = vector.load %arg4[%c0_13, %c0_14] : memref<1x128xf32, #tpu.memory_space<vmem>>, vector<1x128xf32>
    tpu.vector_store %arg4[%c0_13, %c0_14], %36 {strides = array<i32>} : memref<1x128xf32, #tpu.memory_space<vmem>>, vector<1x128xf32>,
    return
  }
  func.func @transform_0(%arg0: i32) -> (i32, i32) {
    %c0_i32 = arith.constant 0 : i32
    %c0_i32_0 = arith.constant 0 : i32
    return %c0_i32, %arg0 : i32, i32
  }
  func.func @transform_1(%arg0: i32) -> (i32, i32, i32) {
    %c0_i32 = arith.constant 0 : i32
    %c0_i32_0 = arith.constant 0 : i32
    %c0_i32_1 = arith.constant 0 : i32
    %c0_i32_2 = arith.constant 0 : i32
    return %c0_i32, %c0_i32_0, %c0_i32_1 : i32, i32, i32
  }
  func.func @transform_2(%arg0: i32) -> (i32, i32) {
    %c0_i32 = arith.constant 0 : i32
    %c0_i32_0 = arith.constant 0 : i32
    %c0_i32_1 = arith.constant 0 : i32
    return %c0_i32, %c0_i32_0 : i32, i32
  }
  func.func @transform_3(%arg0: i32) -> (i32, i32) {
    %c0_i32 = arith.constant 0 : i32
    %c0_i32_0 = arith.constant 0 : i32
    return %c0_i32, %arg0 : i32, i32
  }
}

</mosaic_0001>

<llo_original>
// kernel: tpu_custom_call.1
$region0: #{tpu_custom_call.1}
  #allocation0 [shape = 'u32[]', space=smem, size = 0x4, offset = 0x4, fixed_abs, tag = 'smem constant byte address 0x4 - core index']
  #allocation1 [shape = 'u32[144,128]{1,0:T(1,128)}', space=vmem, size = 0x12000, scoped, tag = 'internal scratch']
  %s0 = inlined_call_operand.vmem [shape: f32[1,128], index: 0, kind: input, shape index: {}]
  %s1 = inlined_call_operand.vmem [shape: bf16[2,64,64], index: 1, kind: input, shape index: {}]
  %s2 = inlined_call_operand.vmem [shape: f32[64,6], index: 2, kind: input, shape index: {}]
  %s3 = inlined_call_operand.hbm [shape: f32[1,128], index: 3, kind: output, shape index: {}]
  %s4 = sld [smem:[#allocation0]]
  $region22: #{tpu_custom_call.1} parent=0
    _
  %s6 = ssub.s32 1, %s4
  %s7 = scalar_select 0, %s6, %s4
  $region1: #{tpu_custom_call.1} parent=0
    #allocation2 [shape = 'u8[512]{0}', space=vmem, size = 0x400, scoped, tag = 'output window, operand 0, single buffered']
    #allocation3 [shape = 's32[1]{0}', space=sflag, size = 0x4, scoped, tag = 'scoped memory for tpu_custom_call.1']
    %8 = vsyncpa [#allocation3], 0
    // Predicated region
    $region2: #{tpu_custom_call.1} parent=1 // pred_check
      _
    $region3: #{tpu_custom_call.1} parent=1 // pred_check_branch
      %10 = sbr.rel (0) target = $region5
    $region4: #{tpu_custom_call.1} parent=1 // pred_region
      _
    $region5: #{tpu_custom_call.1} parent=1 // pred_fallthru
      _
    // Predicated region
    $region6: #{tpu_custom_call.1} parent=1 // pred_check
      _
    $region7: #{tpu_custom_call.1} parent=1 // pred_check_branch
      %12 = sbr.rel (0) target = $region9
    $region8: #{tpu_custom_call.1} parent=1 // pred_region
      _
    $region9: #{tpu_custom_call.1} parent=1 // pred_fallthru
      _
    // Predicated region
    $region10: #{tpu_custom_call.1} parent=1 // pred_check
      _
    $region11: #{tpu_custom_call.1} parent=1 // pred_check_branch
      %14 = sbr.rel (0) target = $region13
    $region12: #{tpu_custom_call.1} parent=1 // pred_region
      _
    $region13: #{tpu_custom_call.1} parent=1 // pred_fallthru
      _
    %v16 = vld [vmem:[%s2] sm:$0xff]
    %v17 = vld [vmem:[%s2 + $0x8] sm:$0xff]
    %v18 = vld [vmem:[%s2 + $0x10] sm:$0xff]
    %v19 = vld [vmem:[%s2 + $0x18] sm:$0xff]
    %v20 = vld [vmem:[%s2 + $0x20] sm:$0xff]
    %v21 = vld [vmem:[%s2 + $0x28] sm:$0xff]
    %v22 = vld [vmem:[%s2 + $0x30] sm:$0xff]
    %v23 = vld [vmem:[%s2 + $0x38] sm:$0xff]
    %v24 = vld [vmem:[%s0] sm:$0x1]
    %26 = vset.pattern.permute.xlu0 0
    %27 = vperm.xlu0 %26, %v16
    %v28 = vpop.permute.xlu0 %27
    %31 = vset.pattern.permute.xlu0 0
    %32 = vperm.xlu0 %31, %v17
    %v33 = vpop.permute.xlu0 %32
    %36 = vset.pattern.permute.xlu0 0
    %37 = vperm.xlu0 %36, %v18
    %v38 = vpop.permute.xlu0 %37
    %41 = vset.pattern.permute.xlu0 0
    %42 = vperm.xlu0 %41, %v19
    %v43 = vpop.permute.xlu0 %42
    %46 = vset.pattern.permute.xlu0 0
    %47 = vperm.xlu0 %46, %v20
    %v48 = vpop.permute.xlu0 %47
    %51 = vset.pattern.permute.xlu0 0
    %52 = vperm.xlu0 %51, %v21
    %v53 = vpop.permute.xlu0 %52
    %56 = vset.pattern.permute.xlu0 0
    %57 = vperm.xlu0 %56, %v22
    %v58 = vpop.permute.xlu0 %57
    %61 = vset.pattern.permute.xlu0 0
    %62 = vperm.xlu0 %61, %v23
    %v63 = vpop.permute.xlu0 %62
    %v66 = vlaneseq
    %v67 = vshrl.u32 %v66, 7
    %v68 = vsub.s32 0, %v67
    %v69 = vrot.slane %v24, %v68
    %v71 = vmul.f32 %v28, %v69
    %v72 = vmul.f32 %v33, %v69
    %v73 = vmul.f32 %v38, %v69
    %v74 = vmul.f32 %v43, %v69
    %v75 = vmul.f32 %v48, %v69
    %v76 = vmul.f32 %v53, %v69
    %v77 = vmul.f32 %v58, %v69
    %v78 = vmul.f32 %v63, %v69
    %79 = vset.pattern.permute.xlu0 1
    %80 = vperm.xlu0 %79, %v16
    %v81 = vpop.permute.xlu0 %80
    %83 = vset.pattern.permute.xlu0 1
    %84 = vperm.xlu0 %83, %v17
    %v85 = vpop.permute.xlu0 %84
    %87 = vset.pattern.permute.xlu0 1
    %88 = vperm.xlu0 %87, %v18
    %v89 = vpop.permute.xlu0 %88
    %91 = vset.pattern.permute.xlu0 1
    %92 = vperm.xlu0 %91, %v19
    %v93 = vpop.permute.xlu0 %92
    %95 = vset.pattern.permute.xlu0 1
    %96 = vperm.xlu0 %95, %v20
    %v97 = vpop.permute.xlu0 %96
    %99 = vset.pattern.permute.xlu0 1
    %100 = vperm.xlu0 %99, %v21
    %v101 = vpop.permute.xlu0 %100
    %103 = vset.pattern.permute.xlu0 1
    %104 = vperm.xlu0 %103, %v22
    %v105 = vpop.permute.xlu0 %104
    %107 = vset.pattern.permute.xlu0 1
    %108 = vperm.xlu0 %107, %v23
    %v109 = vpop.permute.xlu0 %108
    %v111 = vadd.f32 %v71, %v81
    %v112 = vadd.f32 %v72, %v85
    %v113 = vadd.f32 %v73, %v89
    %v114 = vadd.f32 %v74, %v93
    %v115 = vadd.f32 %v75, %v97
    %v116 = vadd.f32 %v76, %v101
    %v117 = vadd.f32 %v77, %v105
    %v118 = vadd.f32 %v78, %v109
    %v119 = vmax.f32 %v111, 0.0
    %v120 = vmax.f32 %v112, 0.0
    %v121 = vmax.f32 %v113, 0.0
    %v122 = vmax.f32 %v114, 0.0
    %v123 = vmax.f32 %v115, 0.0
    %v124 = vmax.f32 %v116, 0.0
    %v125 = vmax.f32 %v117, 0.0
    %v126 = vmax.f32 %v118, 0.0
    %v127 = vld [vmem:[%s1] sm:$0xf]
    %v128 = vld [vmem:[%s1 + $0x4] sm:$0xf]
    %v129 = vld [vmem:[%s1 + $0x8] sm:$0xf]
    %v130 = vld [vmem:[%s1 + $0xc] sm:$0xf]
    %v131 = vld [vmem:[%s1 + $0x10] sm:$0xf]
    %v132 = vld [vmem:[%s1 + $0x14] sm:$0xf]
    %v133 = vld [vmem:[%s1 + $0x18] sm:$0xf]
    %v134 = vld [vmem:[%s1 + $0x1c] sm:$0xf]
    %v135 = vpack.c.bf16 %v120, %v119
    %v136 = vpack.c.bf16 %v122, %v121
    %v137 = vpack.c.bf16 %v124, %v123
    %v138 = vpack.c.bf16 %v126, %v125
    %139 = vset.pattern.permute.xlu0 2
    %140 = vperm.xlu0 %139, %v16
    %v141 = vpop.permute.xlu0 %140
    %143 = vset.pattern.permute.xlu0 2
    %144 = vperm.xlu0 %143, %v17
    %v145 = vpop.permute.xlu0 %144
    %147 = vset.pattern.permute.xlu0 2
    %148 = vperm.xlu0 %147, %v18
    %v149 = vpop.permute.xlu0 %148
    %151 = vset.pattern.permute.xlu0 2
    %152 = vperm.xlu0 %151, %v19
    %v153 = vpop.permute.xlu0 %152
    %155 = vset.pattern.permute.xlu0 2
    %156 = vperm.xlu0 %155, %v20
    %v157 = vpop.permute.xlu0 %156
    %159 = vset.pattern.permute.xlu0 2
    %160 = vperm.xlu0 %159, %v21
    %v161 = vpop.permute.xlu0 %160
    %163 = vset.pattern.permute.xlu0 2
    %164 = vperm.xlu0 %163, %v22
    %v165 = vpop.permute.xlu0 %164
    %167 = vset.pattern.permute.xlu0 2
    %168 = vperm.xlu0 %167, %v23
    %v169 = vpop.permute.xlu0 %168
    %v179 = vunpack.c.l.b16 %v127
    %v180 = vunpack.c.l.b16 %v128
    %v181 = vunpack.c.l.b16 %v129
    %v182 = vunpack.c.l.b16 %v130
    %v183 = vunpack.c.l.b16 %v131
    %v184 = vunpack.c.l.b16 %v132
    %v185 = vunpack.c.l.b16 %v133
    %v186 = vunpack.c.l.b16 %v134
    %v187 = vpack.c.b16 %v180, %v179
    %v188 = vpack.c.b16 %v182, %v181
    %v189 = vpack.c.b16 %v184, %v183
    %v190 = vpack.c.b16 %v186, %v185
    %vm191 = vcmask 523264
    %v193 = vsel %vm191, %v187, 0
    %v196 = vsel %vm191, %v188, 0
    %v199 = vsel %vm191, %v189, 0
    %v202 = vsel %vm191, %v190, 0
    %204 = vmatprep.subr.bf16.mxu0 0
    %205 = vmatpush1.bf16.msra.mxu0 0
    %206 = vmatprep.subr.bf16.mxu0 0
    %207 = vmatpush1.bf16.msra.mxu0 0
    %208 = vmatprep.subr.bf16.mxu0 0
    %209 = vmatpush1.bf16.msra.mxu0 0
    %210 = vmatprep.subr.bf16.mxu0 0
    %211 = vmatpush1.bf16.msra.mxu0 0
    %212 = vmatprep.subr.bf16.mxu0 0
    %213 = vmatpush1.bf16.msra.mxu0 %v138
    %214 = vmatprep.subr.bf16.mxu0 0
    %215 = vmatpush1.bf16.msra.mxu0 %v137
    %216 = vmatprep.subr.bf16.mxu0 0
    %217 = vmatpush1.bf16.msra.mxu0 %v136
    %218 = vmatprep.subr.bf16.mxu0 0
    %219 = vmatpush1.bf16.msra.mxu0 %v135
    %220 = vmatprep.subr.bf16.mxu0 0
    %221 = vmatpush2.bf16.msra.mxu0 0
    %222 = vmatprep.subr.bf16.mxu0 0
    %223 = vmatpush2.bf16.msra.mxu0 0
    %224 = vmatprep.subr.bf16.mxu0 0
    %225 = vmatpush2.bf16.msra.mxu0 0
    %226 = vmatprep.subr.bf16.mxu0 0
    %227 = vmatpush2.bf16.msra.mxu0 0
    %228 = vmatprep.subr.bf16.mxu0 0
    %229 = vmatpush2.bf16.msra.mxu0 0
    %230 = vmatprep.subr.bf16.mxu0 0
    %231 = vmatpush2.bf16.msra.mxu0 0
    %232 = vmatprep.subr.bf16.mxu0 0
    %233 = vmatpush2.bf16.msra.mxu0 0
    %234 = vmatprep.subr.bf16.mxu0 0
    %235 = vmatpush2.bf16.msra.mxu0 0
    %236 = vmatprep.mubr.bf16.mxu0 0
    %237 = vmatmul.mubr.bf16.gmra.mxu0 %v193
    %v238 = vpop.f32.mrf.mxu0
    %v239 = vadd.f32 %v141, %v238
    %v240 = vpop.f32.mrf.mxu0
    %v241 = vpop.f32.mrf.mxu0
    %v242 = vadd.f32 %v145, %v241
    %v243 = vpop.f32.mrf.mxu0
    %244 = vmatprep.mubr.bf16.mxu0 0
    %245 = vmatmul.mubr.bf16.gmra.mxu0 %v196
    %v246 = vpop.f32.mrf.mxu0
    %v247 = vadd.f32 %v149, %v246
    %v248 = vpop.f32.mrf.mxu0
    %v249 = vpop.f32.mrf.mxu0
    %v250 = vadd.f32 %v153, %v249
    %v251 = vpop.f32.mrf.mxu0
    %252 = vmatprep.mubr.bf16.mxu0 0
    %253 = vmatmul.mubr.bf16.gmra.mxu0 %v199
    %v254 = vpop.f32.mrf.mxu0
    %v255 = vadd.f32 %v157, %v254
    %v256 = vpop.f32.mrf.mxu0
    %v257 = vpop.f32.mrf.mxu0
    %v258 = vadd.f32 %v161, %v257
    %v259 = vpop.f32.mrf.mxu0
    %260 = vmatprep.mubr.bf16.mxu0 0
    %261 = vmatmul.mubr.bf16.gmra.mxu0 %v202
    %v262 = vpop.f32.mrf.mxu0
    %v263 = vadd.f32 %v165, %v262
    %v264 = vpop.f32.mrf.mxu0
    %v265 = vpop.f32.mrf.mxu0
    %v266 = vadd.f32 %v169, %v265
    %v267 = vpop.f32.mrf.mxu0
    %268 = vdwg.mxu0
    %v269 = vmax.f32 %v239, 0.0
    %v270 = vmax.f32 %v242, 0.0
    %v271 = vmax.f32 %v247, 0.0
    %v272 = vmax.f32 %v250, 0.0
    %v273 = vmax.f32 %v255, 0.0
    %v274 = vmax.f32 %v258, 0.0
    %v275 = vmax.f32 %v263, 0.0
    %v276 = vmax.f32 %v266, 0.0
    %s277 = scalar_lea.vmem %s1, 32
    %v278 = vld [vmem:[%s277] sm:$0xf]
    %v279 = vld [vmem:[%s277 + $0x4] sm:$0xf]
    %v280 = vld [vmem:[%s277 + $0x8] sm:$0xf]
    %v281 = vld [vmem:[%s277 + $0xc] sm:$0xf]
    %v282 = vld [vmem:[%s277 + $0x10] sm:$0xf]
    %v283 = vld [vmem:[%s277 + $0x14] sm:$0xf]
    %v284 = vld [vmem:[%s277 + $0x18] sm:$0xf]
    %v285 = vld [vmem:[%s277 + $0x1c] sm:$0xf]
    %v286 = vpack.c.bf16 %v270, %v269
    %v287 = vpack.c.bf16 %v272, %v271
    %v288 = vpack.c.bf16 %v274, %v273
    %v289 = vpack.c.bf16 %v276, %v275
    %290 = vset.pattern.permute.xlu0 3
    %291 = vperm.xlu0 %290, %v16
    %v292 = vpop.permute.xlu0 %291
    %294 = vset.pattern.permute.xlu0 3
    %295 = vperm.xlu0 %294, %v17
    %v296 = vpop.permute.xlu0 %295
    %298 = vset.pattern.permute.xlu0 3
    %299 = vperm.xlu0 %298, %v18
    %v300 = vpop.permute.xlu0 %299
    %302 = vset.pattern.permute.xlu0 3
    %303 = vperm.xlu0 %302, %v19
    %v304 = vpop.permute.xlu0 %303
    %306 = vset.pattern.permute.xlu0 3
    %307 = vperm.xlu0 %306, %v20
    %v308 = vpop.permute.xlu0 %307
    %310 = vset.pattern.permute.xlu0 3
    %311 = vperm.xlu0 %310, %v21
    %v312 = vpop.permute.xlu0 %311
    %314 = vset.pattern.permute.xlu0 3
    %315 = vperm.xlu0 %314, %v22
    %v316 = vpop.permute.xlu0 %315
    %318 = vset.pattern.permute.xlu0 3
    %319 = vperm.xlu0 %318, %v23
    %v320 = vpop.permute.xlu0 %319
    %v330 = vunpack.c.l.b16 %v278
    %v331 = vunpack.c.l.b16 %v279
    %v332 = vunpack.c.l.b16 %v280
    %v333 = vunpack.c.l.b16 %v281
    %v334 = vunpack.c.l.b16 %v282
    %v335 = vunpack.c.l.b16 %v283
    %v336 = vunpack.c.l.b16 %v284
    %v337 = vunpack.c.l.b16 %v285
    %v338 = vpack.c.b16 %v331, %v330
    %v339 = vpack.c.b16 %v333, %v332
    %v340 = vpack.c.b16 %v335, %v334
    %v341 = vpack.c.b16 %v337, %v336
    %v343 = vsel %vm191, %v338, 0
    %v346 = vsel %vm191, %v339, 0
    %v349 = vsel %vm191, %v340, 0
    %v352 = vsel %vm191, %v341, 0
    %354 = vmatprep.subr.bf16.mxu0 0
    %355 = vmatpush1.bf16.msra.mxu0 0
    %356 = vmatprep.subr.bf16.mxu0 0
    %357 = vmatpush1.bf16.msra.mxu0 0
    %358 = vmatprep.subr.bf16.mxu0 0
    %359 = vmatpush1.bf16.msra.mxu0 0
    %360 = vmatprep.subr.bf16.mxu0 0
    %361 = vmatpush1.bf16.msra.mxu0 0
    %362 = vmatprep.subr.bf16.mxu0 0
    %363 = vmatpush1.bf16.msra.mxu0 %v289
    %364 = vmatprep.subr.bf16.mxu0 0
    %365 = vmatpush1.bf16.msra.mxu0 %v288
    %366 = vmatprep.subr.bf16.mxu0 0
    %367 = vmatpush1.bf16.msra.mxu0 %v287
    %368 = vmatprep.subr.bf16.mxu0 0
    %369 = vmatpush1.bf16.msra.mxu0 %v286
    %370 = vmatprep.subr.bf16.mxu0 0
    %371 = vmatpush2.bf16.msra.mxu0 0
    %372 = vmatprep.subr.bf16.mxu0 0
    %373 = vmatpush2.bf16.msra.mxu0 0
    %374 = vmatprep.subr.bf16.mxu0 0
    %375 = vmatpush2.bf16.msra.mxu0 0
    %376 = vmatprep.subr.bf16.mxu0 0
    %377 = vmatpush2.bf16.msra.mxu0 0
    %378 = vmatprep.subr.bf16.mxu0 0
    %379 = vmatpush2.bf16.msra.mxu0 0
    %380 = vmatprep.subr.bf16.mxu0 0
    %381 = vmatpush2.bf16.msra.mxu0 0
    %382 = vmatprep.subr.bf16.mxu0 0
    %383 = vmatpush2.bf16.msra.mxu0 0
    %384 = vmatprep.subr.bf16.mxu0 0
    %385 = vmatpush2.bf16.msra.mxu0 0
    %386 = vmatprep.mubr.bf16.mxu0 0
    %387 = vmatmul.mubr.bf16.gmra.mxu0 %v343
    %v388 = vpop.f32.mrf.mxu0
    %v389 = vadd.f32 %v292, %v388
    %v390 = vpop.f32.mrf.mxu0
    %v391 = vpop.f32.mrf.mxu0
    %v392 = vadd.f32 %v296, %v391
    %v393 = vpop.f32.mrf.mxu0
    %394 = vmatprep.mubr.bf16.mxu0 0
    %395 = vmatmul.mubr.bf16.gmra.mxu0 %v346
    %v396 = vpop.f32.mrf.mxu0
    %v397 = vadd.f32 %v300, %v396
    %v398 = vpop.f32.mrf.mxu0
    %v399 = vpop.f32.mrf.mxu0
    %v400 = vadd.f32 %v304, %v399
    %v401 = vpop.f32.mrf.mxu0
    %402 = vmatprep.mubr.bf16.mxu0 0
    %403 = vmatmul.mubr.bf16.gmra.mxu0 %v349
    %v404 = vpop.f32.mrf.mxu0
    %v405 = vadd.f32 %v308, %v404
    %v406 = vpop.f32.mrf.mxu0
    %v407 = vpop.f32.mrf.mxu0
    %v408 = vadd.f32 %v312, %v407
    %v409 = vpop.f32.mrf.mxu0
    %410 = vmatprep.mubr.bf16.mxu0 0
    %411 = vmatmul.mubr.bf16.gmra.mxu0 %v352
    %v412 = vpop.f32.mrf.mxu0
    %v413 = vadd.f32 %v316, %v412
    %v414 = vpop.f32.mrf.mxu0
    %v415 = vpop.f32.mrf.mxu0
    %v416 = vadd.f32 %v320, %v415
    %v417 = vpop.f32.mrf.mxu0
    %418 = vdwg.mxu0
    %v419 = vmax.f32 %v389, 0.0
    %v420 = vmax.f32 %v392, 0.0
    %v421 = vmax.f32 %v397, 0.0
    %v422 = vmax.f32 %v400, 0.0
    %v423 = vmax.f32 %v405, 0.0
    %v424 = vmax.f32 %v408, 0.0
    %v425 = vmax.f32 %v413, 0.0
    %v426 = vmax.f32 %v416, 0.0
    %427 = vset.pattern.permute.xlu0 4
    %428 = vperm.xlu0 %427, %v16
    %v429 = vpop.permute.xlu0 %428
    %431 = vset.pattern.permute.xlu0 4
    %432 = vperm.xlu0 %431, %v17
    %v433 = vpop.permute.xlu0 %432
    %435 = vset.pattern.permute.xlu0 4
    %436 = vperm.xlu0 %435, %v18
    %v437 = vpop.permute.xlu0 %436
    %439 = vset.pattern.permute.xlu0 4
    %440 = vperm.xlu0 %439, %v19
    %v441 = vpop.permute.xlu0 %440
    %443 = vset.pattern.permute.xlu0 4
    %444 = vperm.xlu0 %443, %v20
    %v445 = vpop.permute.xlu0 %444
    %447 = vset.pattern.permute.xlu0 4
    %448 = vperm.xlu0 %447, %v21
    %v449 = vpop.permute.xlu0 %448
    %451 = vset.pattern.permute.xlu0 4
    %452 = vperm.xlu0 %451, %v22
    %v453 = vpop.permute.xlu0 %452
    %455 = vset.pattern.permute.xlu0 4
    %456 = vperm.xlu0 %455, %v23
    %v457 = vpop.permute.xlu0 %456
    %v459 = vmul.f32 %v429, %v419
    %v460 = vmul.f32 %v433, %v420
    %v461 = vmul.f32 %v437, %v421
    %v462 = vmul.f32 %v441, %v422
    %v463 = vmul.f32 %v445, %v423
    %v464 = vmul.f32 %v449, %v424
    %v465 = vmul.f32 %v453, %v425
    %v466 = vmul.f32 %v457, %v426
    %v467 = vadd.f32 %v459, %v460
    %v468 = vadd.f32 %v467, %v461
    %v469 = vadd.f32 %v468, %v462
    %v470 = vadd.f32 %v469, %v463
    %v471 = vadd.f32 %v470, %v464
    %v472 = vadd.f32 %v471, %v465
    %v473 = vadd.f32 %v472, %v466
    %v474 = vrot.slane %v473, 4
    %v475 = vadd.f32 %v473, %v474
    %v476 = vrot.slane %v475, 2
    %v477 = vadd.f32 %v475, %v476
    %v478 = vrot.slane %v477, 1
    %v479 = vadd.f32 %v477, %v478
    %480 = vset.pattern.permute.xlu0 5
    %481 = vperm.xlu0 %480, %v16
    %v482 = vpop.permute.xlu0 %481
    %v484 = vadd.f32 %v479, %v482
    %485 = vst [vmem:[#allocation2] sm:$0x1] %v484
    // Predicated region
    $region14: #{tpu_custom_call.1} parent=1 // pred_check
      _
    $region15: #{tpu_custom_call.1} parent=1 // pred_check_branch
      %487 = sbr.rel (0) target = $region17
    $region16: #{tpu_custom_call.1} parent=1 // pred_region
      %s489 = ssub.s32 16, 16
      %490 = vsyncadd [#allocation3], %s489
      %s492 = sshll.u32 [#allocation2], 4
      %s493 = int_to_ptr.vmem [resolvable:$true] %s492
      %495 = dma.vmem_to_hbm [thread:$0]  %s493, 16, %s3, [#allocation3]
    $region17: #{tpu_custom_call.1} parent=1 // pred_fallthru
      _
    // Predicated region
    $region18: #{tpu_custom_call.1} parent=1 // pred_check
      _
    $region19: #{tpu_custom_call.1} parent=1 // pred_check_branch
      %497 = sbr.rel (0) target = $region21
    $region20: #{tpu_custom_call.1} parent=1 // pred_region
      %498 = dma.done [#allocation3], 16
    $region21: #{tpu_custom_call.1} parent=1 // pred_fallthru
      _
    %499 = vsyncpa [#allocation3], 1

</llo_original>
